<compile_context>
chip_gen: v5e
topology: v5e:2x2
jax: 0.10.0
libtpu: 0.0.40
codegen_flags: <defaults>
</compile_context>

<pallas_src>
import functools

import jax
import jax.numpy as jnp
from jax.experimental import pallas as pl
from jax.experimental.pallas import tpu as pltpu

LN_EPS = 1e-5


def _round_up(x, m):
    return (x + m - 1) // m * m


def _vmem_budget_bytes():
    """~75% of this generation's physical VMEM (v5e/v6e 128MiB, v7x 64MiB)."""
    cap = None
    try:
        cap = getattr(pltpu.get_tpu_info(), "vmem_capacity_bytes", None)
    except Exception:
        cap = None
    if not cap:
        cap = 64 << 20          # conservative fallback (v7x physical size)
    return int(cap) * 3 // 4


def _layernorm_f32(x, gamma, beta, h_real):
    """LayerNorm over the real hidden size; lanes >= h_real are zero padding."""
    hp = x.shape[-1]
    inv_h = 1.0 / h_real
    mean = jnp.sum(x, axis=-1, keepdims=True) * inv_h
    xc = x - mean
    if h_real != hp:
        lane = jax.lax.broadcasted_iota(jnp.int32, x.shape, dimension=1)
        xc = jnp.where(lane < h_real, xc, 0.0)
    var = jnp.sum(xc * xc, axis=-1, keepdims=True) * inv_h
    inv = jax.lax.rsqrt(var + LN_EPS)
    # gamma/beta are zero-padded, so padded lanes of the result are exactly 0.
    return xc * inv * gamma + beta


def _resident_kernel(x_ref, gamma_ref, beta_ref, w1t_ref, b1_ref, w2t_ref,
                     b2_ref, o_ref, *, h_real):
    """Both (Hp, Hp) weights resident in VMEM; 1-D grid over row tiles."""
    x = x_ref[...].astype(jnp.float32)
    ln = _layernorm_f32(x, gamma_ref[...], beta_ref[...], h_real)
    h = jnp.dot(ln.astype(w1t_ref.dtype), w1t_ref[...],
                preferred_element_type=jnp.float32) + b1_ref[...]
    h = h * jax.nn.sigmoid(h)                              # SiLU
    y = jnp.dot(h.astype(w2t_ref.dtype), w2t_ref[...],
                preferred_element_type=jnp.float32) + b2_ref[...]
    # Dropout: eval-mode identity (see TODO at top of file).
    o_ref[...] = (x + y).astype(o_ref.dtype)


def _streamed_kernel(x_ref, gamma_ref, beta_ref, w1t_ref, b1_ref, w2t_ref,
                     b2_ref, o_ref, ln_ref, acc_ref, *, h_real):
    """Weights streamed in tk-wide chunks along the intermediate dim.

    Grid = (row_tiles, Hp // tk); innermost axis is the reduction:
      h_k = SiLU(ln @ W1t[:, k]) ; acc += h_k @ W2t[k, :]
    """
    k = pl.program_id(1)

    @pl.when(k == 0)
    def _():
        x = x_ref[...].astype(jnp.float32)
        ln = _layernorm_f32(x, gamma_ref[...], beta_ref[...], h_real)
        ln_ref[...] = ln.astype(ln_ref.dtype)
        acc_ref[...] = jnp.zeros_like(acc_ref)

    h = jnp.dot(ln_ref[...], w1t_ref[...],
                preferred_element_type=jnp.float32) + b1_ref[...]
    h = h * jax.nn.sigmoid(h)                              # SiLU
    acc_ref[...] += jnp.dot(h.astype(w2t_ref.dtype), w2t_ref[...],
                            preferred_element_type=jnp.float32)

    @pl.when(k == pl.num_programs(1) - 1)
    def _():
        y = acc_ref[...] + b2_ref[...]
        # Dropout: eval-mode identity.
        o_ref[...] = (x_ref[...].astype(jnp.float32) + y).astype(o_ref.dtype)


def prepare_params(gamma, beta, w1, b1, w2, b2, compute_dtype=jnp.bfloat16):
    """One-time parameter prep (at load time, NOT per forward call): transpose
    the Linear weights, cast them to the matmul compute dtype, and zero-pad
    everything to a lane-dense hidden size (multiple of 128)."""
    H = w1.shape[0]
    Hp = max(128, _round_up(H, 128))
    pad = Hp - H

    def pad_vec(v):
        return jnp.pad(v.astype(jnp.float32), (0, pad)).reshape(1, Hp)

    w1t = jnp.pad(jnp.transpose(w1).astype(compute_dtype), ((0, pad), (0, pad)))
    w2t = jnp.pad(jnp.transpose(w2).astype(compute_dtype), ((0, pad), (0, pad)))
    return (pad_vec(gamma), pad_vec(beta), w1t, pad_vec(b1), w2t, pad_vec(b2))


@functools.partial(jax.jit, static_argnames=("tm", "d_chunk", "force_stream"))
def diffusion_block_v2(x, gamma_p, beta_p, w1t, b1_p, w2t, b2_p,
                       tm=0, d_chunk=512, force_stream=False):
    """x: [..., H] (f32 or bf16; output dtype == input dtype).
    Params come from prepare_params() (pre-transposed, lane-padded)."""
    orig_shape = x.shape
    H = orig_shape[-1]
    Hp = w1t.shape[0]
    assert w1t.shape == (Hp, Hp) and w2t.shape == (Hp, Hp)
    assert gamma_p.shape == (1, Hp)

    x2d = x.reshape(-1, H)
    N = x2d.shape[0]
    if Hp != H:                       # uncommon: H not already lane-dense
        x2d = jnp.pad(x2d, ((0, 0), (0, Hp - H)))

    x_bytes = jnp.dtype(x.dtype).itemsize
    w_bytes = jnp.dtype(w1t.dtype).itemsize

    # ---- Row tile: >= ~2 MiB of x traffic per step, 128-granular for the
    # MXU, >= 2 blocks when N is non-trivial (v7x megacore), never (much)
    # larger than the data. ----
    if tm:
        tm_eff = min(_round_up(tm, 8), _round_up(N, 8))
    else:
        tgt = _round_up(max(1, (2 << 20) // (Hp * x_bytes)), 128)
        tm_eff = max(256, min(tgt, 1024))
        if N > 256:
            tm_eff = min(tm_eff, _round_up(pl.cdiv(N, 2), 128))
        tm_eff = min(tm_eff, _round_up(N, 8))
    tm_eff = max(tm_eff, 8)
    grid_rows = pl.cdiv(N, tm_eff)    # ragged last block handled by Pallas

    budget = _vmem_budget_bytes()
    resident_need = (4 * tm_eff * Hp * x_bytes        # 2x in + 2x out tiles
                     + 2 * Hp * Hp * w_bytes          # resident weights (1 buf)
                     + 6 * tm_eff * Hp * 4            # f32 intermediates
                     + 8 * Hp * 4)                    # gamma/beta/b1/b2
    use_stream = bool(force_stream) or (resident_need > budget)

    if not use_stream:
        kernel = functools.partial(_resident_kernel, h_real=H)
        grid = (grid_rows,)
        row_spec = pl.BlockSpec((tm_eff, Hp), lambda i: (i, 0))
        vec_spec = pl.BlockSpec((1, Hp), lambda i: (0, 0),
                                pipeline_mode=pl.Buffered(1))
        mat_spec = pl.BlockSpec((Hp, Hp), lambda i: (0, 0),
                                pipeline_mode=pl.Buffered(1))
        in_specs = [row_spec, vec_spec, vec_spec,
                    mat_spec, vec_spec, mat_spec, vec_spec]
        scratch = ()
        dims = ("parallel",)
        vmem_need = resident_need
    else:
        # Weight-streaming path (large Hp / v7x): tk must divide Hp.
        tk = min(_round_up(d_chunk, 128), Hp)
        while Hp % tk:
            tk -= 128
        kernel = functools.partial(_streamed_kernel, h_real=H)
        grid = (grid_rows, Hp // tk)
        row_spec = pl.BlockSpec((tm_eff, Hp), lambda i, k: (i, 0))
        vec_spec = pl.BlockSpec((1, Hp), lambda i, k: (0, 0),
                                pipeline_mode=pl.Buffered(1))
        w1_spec = pl.BlockSpec((Hp, tk), lambda i, k: (0, k))
        b1_spec = pl.BlockSpec((1, tk), lambda i, k: (0, k))
        w2_spec = pl.BlockSpec((tk, Hp), lambda i, k: (k, 0))
        in_specs = [row_spec, vec_spec, vec_spec,
                    w1_spec, b1_spec, w2_spec, vec_spec]
        scratch = (pltpu.VMEM((tm_eff, Hp), w1t.dtype),     # ln (compute dtype)
                   pltpu.VMEM((tm_eff, Hp), jnp.float32))   # y accumulator
        dims = ("parallel", "arbitrary")
        vmem_need = (4 * tm_eff * Hp * x_bytes               # 2x in + 2x out
                     + 4 * Hp * tk * w_bytes                 # 2x two weight chunks
                     + tm_eff * Hp * (w_bytes + 4)           # ln + acc scratch
                     + 6 * tm_eff * tk * 4                   # f32 intermediates
                     + 8 * Hp * 4)

    vmem_limit = int(min(max(vmem_need + (4 << 20), 16 << 20), budget))

    cost = pl.CostEstimate(
        flops=int(4 * N * Hp * Hp + 12 * N * Hp),
        transcendentals=int(N * Hp),
        bytes_accessed=int(2 * N * Hp * x_bytes + 2 * Hp * Hp * w_bytes
                           + 6 * Hp * 4),
    )

    out = pl.pallas_call(
        kernel,
        out_shape=jax.ShapeDtypeStruct((N, Hp), x.dtype),
        grid_spec=pltpu.PrefetchScalarGridSpec(
            num_scalar_prefetch=0,
            grid=grid,
            in_specs=in_specs,
            out_specs=row_spec,
            scratch_shapes=scratch),
        compiler_params=pltpu.CompilerParams(
            dimension_semantics=dims,
            vmem_limit_bytes=vmem_limit),
        cost_estimate=cost,
    )(x2d, gamma_p, beta_p, w1t, b1_p, w2t, b2_p)

    if Hp != H:
        out = out[:, :H]
    return out.reshape(orig_shape)


def _reference(x, gamma, beta, w1, b1, w2, b2):
    mean = jnp.mean(x, axis=-1, keepdims=True)
    var = jnp.mean((x - mean) ** 2, axis=-1, keepdims=True)
    ln = (x - mean) / jnp.sqrt(var + LN_EPS) * gamma + beta
    h = ln @ w1.T + b1
    h = h * jax.nn.sigmoid(h)
    y = h @ w2.T + b2
    return x + y


if __name__ == "__main__":
    # --- small shape matching the module (hidden=32) ---
    B, S, H = 2, 8, 32
    key = jax.random.PRNGKey(0)
    kx, k1, k2, kb1, kb2 = jax.random.split(key, 5)

    x = jax.random.normal(kx, (B, S, H), dtype=jnp.float32)

    bound = 1.0 / float(H) ** 0.5
    gamma = jnp.ones((H,), jnp.float32)
    beta = jnp.zeros((H,), jnp.float32)
    w1 = jax.random.uniform(k1, (H, H), jnp.float32, -bound, bound)
    b1 = jax.random.uniform(kb1, (H,), jnp.float32, -bound, bound)
    w2 = jax.random.uniform(k2, (H, H), jnp.float32, -bound, bound)
    b2 = jax.random.uniform(kb2, (H,), jnp.float32, -bound, bound)

    ref = _reference(x, gamma, beta, w1, b1, w2, b2)

    # f32-weight path: strict check (validation only).
    params_f32 = prepare_params(gamma, beta, w1, b1, w2, b2,
                                compute_dtype=jnp.float32)
    out_f32 = jax.block_until_ready(diffusion_block_v2(x, *params_f32))
    assert out_f32.shape == x.shape and out_f32.dtype == x.dtype
    assert jnp.allclose(out_f32, ref, atol=2e-4, rtol=2e-4), "f32 path mismatch"

    # bf16-weight path (production default, f32 accumulation): relaxed tol.
    params_bf16 = prepare_params(gamma, beta, w1, b1, w2, b2)
    out_bf16 = jax.block_until_ready(diffusion_block_v2(x, *params_bf16))
    assert jnp.allclose(out_bf16, ref, atol=3e-2, rtol=3e-2), "bf16 path mismatch"

    # Lane-dense hidden size + token count not divisible by the row tile
    # (no wrapper pad/slice; ragged last row block handled by Pallas).
    B2, S2, H2 = 3, 200, 256
    x2 = jax.random.normal(jax.random.PRNGKey(1), (B2, S2, H2), dtype=jnp.float32)
    g2 = jnp.ones((H2,), jnp.float32)
    be2 = jnp.zeros((H2,), jnp.float32)
    bound2 = 1.0 / float(H2) ** 0.5
    kk = jax.random.split(jax.random.PRNGKey(2), 4)
    w1b = jax.random.uniform(kk[0], (H2, H2), jnp.float32, -bound2, bound2)
    b1b = jax.random.uniform(kk[1], (H2,), jnp.float32, -bound2, bound2)
    w2b = jax.random.uniform(kk[2], (H2, H2), jnp.float32, -bound2, bound2)
    b2b = jax.random.uniform(kk[3], (H2,), jnp.float32, -bound2, bound2)
    params2 = prepare_params(g2, be2, w1b, b1b, w2b, b2b)
    ref2 = _reference(x2, g2, be2, w1b, b1b, w2b, b2b)

    out2 = jax.block_until_ready(diffusion_block_v2(x2, *params2))
    assert jnp.allclose(out2, ref2, atol=3e-2, rtol=3e-2), "large-shape mismatch"

    # bf16 activations end-to-end (halves HBM traffic; output dtype bf16).
    x2_bf16 = x2.astype(jnp.bfloat16)
    ref2_bf16in = _reference(x2_bf16.astype(jnp.float32), g2, be2,
                             w1b, b1b, w2b, b2b)
    out2_bf16 = jax.block_until_ready(diffusion_block_v2(x2_bf16, *params2))
    assert out2_bf16.dtype == jnp.bfloat16
    assert jnp.allclose(out2_bf16.astype(jnp.float32), ref2_bf16in,
                        atol=6e-2, rtol=6e-2), "bf16 activation mismatch"

    # Weight-streaming path (forced with 128-wide chunks -> 2 reduction steps)
    # exercises the large-Hp / v7x code path at a small shape.
    out2_stream = jax.block_until_ready(
        diffusion_block_v2(x2, *params2, d_chunk=128, force_stream=True))
    assert jnp.allclose(out2_stream, ref2, atol=3e-2, rtol=3e-2), \
        "streamed path mismatch"

    print("KERNEL_OK")
</pallas_src>

<mosaic_0001>
module attributes {stable_mosaic.version = 11 : i64} {
  func.func @_resident_kernel(%arg0: i32, %arg1: memref<16x128xf32, #tpu.memory_space<vmem>>, %arg2: memref<1x128xf32, #tpu.memory_space<vmem>>, %arg3: memref<1x128xf32, #tpu.memory_space<vmem>>, %arg4: memref<128x128xf32, #tpu.memory_space<vmem>>, %arg5: memref<1x128xf32, #tpu.memory_space<vmem>>, %arg6: memref<128x128xf32, #tpu.memory_space<vmem>>, %arg7: memref<1x128xf32, #tpu.memory_space<vmem>>, %arg8: memref<16x128xf32, #tpu.memory_space<vmem>>) attributes {dimension_semantics = [#tpu.dimension_semantics<parallel>], iteration_bounds = array<i64: 1>, scalar_prefetch = 0 : i64, scratch_operands = 0 : i64, tpu.core_type = #tpu.core_type<tc>, window_params = [{transform_indices = @transform_0, window_bounds = array<i64: 16, 128>}, {pipeline_mode = #tpu.pipeline_mode<synchronous>, transform_indices = @transform_1, window_bounds = array<i64: 1, 128>}, {pipeline_mode = #tpu.pipeline_mode<synchronous>, transform_indices = @transform_2, window_bounds = array<i64: 1, 128>}, {pipeline_mode = #tpu.pipeline_mode<synchronous>, transform_indices = @transform_3, window_bounds = array<i64: 128, 128>}, {pipeline_mode = #tpu.pipeline_mode<synchronous>, transform_indices = @transform_4, window_bounds = array<i64: 1, 128>}, {pipeline_mode = #tpu.pipeline_mode<synchronous>, transform_indices = @transform_5, window_bounds = array<i64: 128, 128>}, {pipeline_mode = #tpu.pipeline_mode<synchronous>, transform_indices = @transform_6, window_bounds = array<i64: 1, 128>}, {transform_indices = @transform_7, window_bounds = array<i64: 16, 128>}]} {
    %c0 = arith.constant 0 : index
    %c0_0 = arith.constant 0 : index
    %0 = vector.load %arg1[%c0, %c0_0] : memref<16x128xf32, #tpu.memory_space<vmem>>, vector<16x128xf32>
    %c0_1 = arith.constant 0 : index
    %c0_2 = arith.constant 0 : index
    %1 = vector.load %arg2[%c0_1, %c0_2] : memref<1x128xf32, #tpu.memory_space<vmem>>, vector<1x128xf32>
    %c0_3 = arith.constant 0 : index
    %c0_4 = arith.constant 0 : index
    %2 = vector.load %arg3[%c0_3, %c0_4] : memref<1x128xf32, #tpu.memory_space<vmem>>, vector<1x128xf32>
    %cst = arith.constant dense<0.000000e+00> : vector<16xf32>
    %3 = vector.multi_reduction <add>, %0, %cst [1] : vector<16x128xf32> to vector<16xf32>
    %4 = vector.shape_cast %3 : vector<16xf32> to vector<16x1xf32>
    %cst_5 = arith.constant 3.125000e-02 : f32
    %5 = vector.broadcast %cst_5 : f32 to vector<16x1xf32>
    %6 = arith.mulf %4, %5 : vector<16x1xf32>
    %7 = vector.broadcast %6 : vector<16x1xf32> to vector<16x128xf32>
    %8 = arith.subf %0, %7 : vector<16x128xf32>
    %9 = tpu.iota {dimensions = array<i32: 1>} : vector<16x128xi32>
    %c32_i32 = arith.constant 32 : i32
    %10 = vector.broadcast %c32_i32 : i32 to vector<16x128xi32>
    %11 = arith.cmpi slt, %9, %10 : vector<16x128xi32>
    %cst_6 = arith.constant 0.000000e+00 : f32
    %12 = vector.broadcast %cst_6 : f32 to vector<16x128xf32>
    %13 = arith.select %11, %8, %12 : vector<16x128xi1>, vector<16x128xf32>
    %14 = arith.mulf %13, %13 : vector<16x128xf32>
    %cst_7 = arith.constant dense<0.000000e+00> : vector<16xf32>
    %15 = vector.multi_reduction <add>, %14, %cst_7 [1] : vector<16x128xf32> to vector<16xf32>
    %16 = vector.shape_cast %15 : vector<16xf32> to vector<16x1xf32>
    %cst_8 = arith.constant 3.125000e-02 : f32
    %17 = vector.broadcast %cst_8 : f32 to vector<16x1xf32>
    %18 = arith.mulf %16, %17 : vector<16x1xf32>
    %cst_9 = arith.constant 9.99999974E-6 : f32
    %19 = vector.broadcast %cst_9 : f32 to vector<16x1xf32>
    %20 = arith.addf %18, %19 : vector<16x1xf32>
    %21 = math.rsqrt %20 : vector<16x1xf32>
    %22 = vector.broadcast %21 : vector<16x1xf32> to vector<16x128xf32>
    %23 = arith.mulf %13, %22 : vector<16x128xf32>
    %24 = vector.broadcast %1 : vector<1x128xf32> to vector<16x128xf32>
    %25 = arith.mulf %23, %24 : vector<16x128xf32>
    %26 = vector.broadcast %2 : vector<1x128xf32> to vector<16x128xf32>
    %27 = arith.addf %25, %26 : vector<16x128xf32>
    %c0_10 = arith.constant 0 : index
    %c0_11 = arith.constant 0 : index
    %28 = vector.load %arg4[%c0_10, %c0_11] : memref<128x128xf32, #tpu.memory_space<vmem>>, vector<128x128xf32>
    %cst_12 = arith.constant dense<0.000000e+00> : vector<16x128xf32>
    %29 = tpu.matmul %27, %28, %cst_12 {dimension_numbers = #tpu.dot_dimension_numbers<[1], [0], [0], [1], [0, 0, 1, 1], [], []>} : vector<16x128xf32>, vector<128x128xf32>, vector<16x128xf32> -> vector<16x128xf32>
    %c0_13 = arith.constant 0 : index
    %c0_14 = arith.constant 0 : index
    %30 = vector.load %arg5[%c0_13, %c0_14] : memref<1x128xf32, #tpu.memory_space<vmem>>, vector<1x128xf32>
    %31 = vector.broadcast %30 : vector<1x128xf32> to vector<16x128xf32>
    %32 = arith.addf %29, %31 : vector<16x128xf32>
    %33 = arith.negf %32 : vector<16x128xf32>
    %34 = math.exp %33 : vector<16x128xf32>
    %cst_15 = arith.constant 1.000000e+00 : f32
    %35 = vector.broadcast %cst_15 : f32 to vector<16x128xf32>
    %36 = arith.addf %35, %34 : vector<16x128xf32>
    %37 = arith.divf %35, %36 : vector<16x128xf32>
    %38 = arith.mulf %32, %37 : vector<16x128xf32>
    %c0_16 = arith.constant 0 : index
    %c0_17 = arith.constant 0 : index
    %39 = vector.load %arg6[%c0_16, %c0_17] : memref<128x128xf32, #tpu.memory_space<vmem>>, vector<128x128xf32>
    %cst_18 = arith.constant dense<0.000000e+00> : vector<16x128xf32>
    %40 = tpu.matmul %38, %39, %cst_18 {dimension_numbers = #tpu.dot_dimension_numbers<[1], [0], [0], [1], [0, 0, 1, 1], [], []>} : vector<16x128xf32>, vector<128x128xf32>, vector<16x128xf32> -> vector<16x128xf32>
    %c0_19 = arith.constant 0 : index
    %c0_20 = arith.constant 0 : index
    %41 = vector.load %arg7[%c0_19, %c0_20] : memref<1x128xf32, #tpu.memory_space<vmem>>, vector<1x128xf32>
    %42 = vector.broadcast %41 : vector<1x128xf32> to vector<16x128xf32>
    %43 = arith.addf %40, %42 : vector<16x128xf32>
    %44 = arith.addf %0, %43 : vector<16x128xf32>
    %c0_21 = arith.constant 0 : index
    %c0_22 = arith.constant 0 : index
    %45 = vector.load %arg8[%c0_21, %c0_22] : memref<16x128xf32, #tpu.memory_space<vmem>>, vector<16x128xf32>
    tpu.vector_store %arg8[%c0_21, %c0_22], %44 {strides = array<i32>} : memref<16x128xf32, #tpu.memory_space<vmem>>, vector<16x128xf32>,
    return
  }
  func.func @transform_0(%arg0: i32) -> (i32, i32) {
    %c0_i32 = arith.constant 0 : i32
    %c0_i32_0 = arith.constant 0 : i32
    return %arg0, %c0_i32 : i32, i32
  }
  func.func @transform_1(%arg0: i32) -> (i32, i32) {
    %c0_i32 = arith.constant 0 : i32
    %c0_i32_0 = arith.constant 0 : i32
    %c0_i32_1 = arith.constant 0 : i32
    return %c0_i32, %c0_i32_0 : i32, i32
  }
  func.func @transform_2(%arg0: i32) -> (i32, i32) {
    %c0_i32 = arith.constant 0 : i32
    %c0_i32_0 = arith.constant 0 : i32
    %c0_i32_1 = arith.constant 0 : i32
    return %c0_i32, %c0_i32_0 : i32, i32
  }
  func.func @transform_3(%arg0: i32) -> (i32, i32) {
    %c0_i32 = arith.constant 0 : i32
    %c0_i32_0 = arith.constant 0 : i32
    %c0_i32_1 = arith.constant 0 : i32
    return %c0_i32, %c0_i32_0 : i32, i32
  }
  func.func @transform_4(%arg0: i32) -> (i32, i32) {
    %c0_i32 = arith.constant 0 : i32
    %c0_i32_0 = arith.constant 0 : i32
    %c0_i32_1 = arith.constant 0 : i32
    return %c0_i32, %c0_i32_0 : i32, i32
  }
  func.func @transform_5(%arg0: i32) -> (i32, i32) {
    %c0_i32 = arith.constant 0 : i32
    %c0_i32_0 = arith.constant 0 : i32
    %c0_i32_1 = arith.constant 0 : i32
    return %c0_i32, %c0_i32_0 : i32, i32
  }
  func.func @transform_6(%arg0: i32) -> (i32, i32) {
    %c0_i32 = arith.constant 0 : i32
    %c0_i32_0 = arith.constant 0 : i32
    %c0_i32_1 = arith.constant 0 : i32
    return %c0_i32, %c0_i32_0 : i32, i32
  }
  func.func @transform_7(%arg0: i32) -> (i32, i32) {
    %c0_i32 = arith.constant 0 : i32
    %c0_i32_0 = arith.constant 0 : i32
    return %arg0, %c0_i32 : i32, i32
  }
}

</mosaic_0001>

<llo_original>
// kernel: diffusion_block_v2.1
$region0: #{diffusion_block_v2.1}
  #allocation0 [shape = 'u32[]', space=smem, size = 0x4, offset = 0x4, fixed_abs, tag = 'smem constant byte address 0x4 - core index']
  #allocation1 [shape = 'u32[72,128]{1,0:T(1,128)}', space=vmem, size = 0x9000, scoped, tag = 'internal scratch']
  %s0 = inlined_call_operand.vmem [shape: f32[16,128], index: 0, kind: input, shape index: {}]
  %s1 = inlined_call_operand.vmem [shape: f32[1,128], index: 1, kind: input, shape index: {}]
  %s2 = inlined_call_operand.vmem [shape: f32[1,128], index: 2, kind: input, shape index: {}]
  %s3 = inlined_call_operand.hbm [shape: f32[128,128], index: 3, kind: input, shape index: {}]
  %s4 = inlined_call_operand.vmem [shape: f32[1,128], index: 4, kind: input, shape index: {}]
  %s5 = inlined_call_operand.hbm [shape: f32[128,128], index: 5, kind: input, shape index: {}]
  %s6 = inlined_call_operand.vmem [shape: f32[1,128], index: 6, kind: input, shape index: {}]
  %s7 = inlined_call_operand.vmem [shape: f32[16,128], index: 7, kind: output, shape index: {}]
  %s8 = sld [smem:[#allocation0]]
  $region46: #{diffusion_block_v2.1} parent=0
    _
  %s10 = ssub.s32 1, %s8
  %s11 = scalar_select 0, %s10, %s8
  $region1: #{diffusion_block_v2.1} parent=0
    #allocation2 [shape = 'u8[65536]{0}', space=vmem, size = 0x10000, scoped, tag = 'input window, operand 3, single buffered']
    #allocation3 [shape = 's32[1]{0}', space=sflag, size = 0x4, scoped, tag = 'scoped memory for diffusion_block_v2.1']
    #allocation4 [shape = 'u8[65536]{0}', space=vmem, size = 0x10000, scoped, tag = 'input window, operand 5, single buffered']
    #allocation5 [shape = 's32[1]{0}', space=sflag, size = 0x4, scoped, tag = 'scoped memory for diffusion_block_v2.1']
    %12 = vsyncpa [#allocation3], 0
    %13 = vsyncpa [#allocation5], 0
    // Predicated region
    $region2: #{diffusion_block_v2.1} parent=1 // pred_check
      _
    $region3: #{diffusion_block_v2.1} parent=1 // pred_check_branch
      %15 = sbr.rel (0) target = $region5
    $region4: #{diffusion_block_v2.1} parent=1 // pred_region
      _
    $region5: #{diffusion_block_v2.1} parent=1 // pred_fallthru
      _
    // Predicated region
    $region6: #{diffusion_block_v2.1} parent=1 // pred_check
      _
    $region7: #{diffusion_block_v2.1} parent=1 // pred_check_branch
      %17 = sbr.rel (0) target = $region9
    $region8: #{diffusion_block_v2.1} parent=1 // pred_region
      _
    $region9: #{diffusion_block_v2.1} parent=1 // pred_fallthru
      _
    // Predicated region
    $region10: #{diffusion_block_v2.1} parent=1 // pred_check
      _
    $region11: #{diffusion_block_v2.1} parent=1 // pred_check_branch
      %19 = sbr.rel (0) target = $region13
    $region12: #{diffusion_block_v2.1} parent=1 // pred_region
      _
    $region13: #{diffusion_block_v2.1} parent=1 // pred_fallthru
      _
    // Predicated region
    $region14: #{diffusion_block_v2.1} parent=1 // pred_check
      _
    $region15: #{diffusion_block_v2.1} parent=1 // pred_check_branch
      %21 = sbr.rel (0) target = $region17
    $region16: #{diffusion_block_v2.1} parent=1 // pred_region
      %23 = vsyncadd [#allocation3], 0
      %s24 = sshll.u32 %s3, 4
      %s25 = int_to_ptr.hbm [resolvable:$true] %s24
      %s26 = sshll.u32 [#allocation2], 4
      %s27 = int_to_ptr.vmem [resolvable:$true] %s26
      %32 = dma.hbm_to_vmem [thread:$0]  %s25, 2048, %s27, [#allocation3], 128, 128, 8
    $region17: #{diffusion_block_v2.1} parent=1 // pred_fallthru
      _
    // Predicated region
    $region18: #{diffusion_block_v2.1} parent=1 // pred_check
      _
    $region19: #{diffusion_block_v2.1} parent=1 // pred_check_branch
      %34 = sbr.rel (0) target = $region21
    $region20: #{diffusion_block_v2.1} parent=1 // pred_region
      _
    $region21: #{diffusion_block_v2.1} parent=1 // pred_fallthru
      _
    // Predicated region
    $region22: #{diffusion_block_v2.1} parent=1 // pred_check
      _
    $region23: #{diffusion_block_v2.1} parent=1 // pred_check_branch
      %36 = sbr.rel (0) target = $region25
    $region24: #{diffusion_block_v2.1} parent=1 // pred_region
      %38 = vsyncadd [#allocation5], 0
      %s39 = sshll.u32 %s5, 4
      %s40 = int_to_ptr.hbm [resolvable:$true] %s39
      %s41 = sshll.u32 [#allocation4], 4
      %s42 = int_to_ptr.vmem [resolvable:$true] %s41
      %47 = dma.hbm_to_vmem [thread:$0]  %s40, 2048, %s42, [#allocation5], 128, 128, 8
    $region25: #{diffusion_block_v2.1} parent=1 // pred_fallthru
      _
    // Predicated region
    $region26: #{diffusion_block_v2.1} parent=1 // pred_check
      _
    $region27: #{diffusion_block_v2.1} parent=1 // pred_check_branch
      %49 = sbr.rel (0) target = $region29
    $region28: #{diffusion_block_v2.1} parent=1 // pred_region
      _
    $region29: #{diffusion_block_v2.1} parent=1 // pred_fallthru
      _
    // Predicated region
    $region30: #{diffusion_block_v2.1} parent=1 // pred_check
      _
    $region31: #{diffusion_block_v2.1} parent=1 // pred_check_branch
      %51 = sbr.rel (0) target = $region33
    $region32: #{diffusion_block_v2.1} parent=1 // pred_region
      %53 = dma.done [#allocation3], 2048
    $region33: #{diffusion_block_v2.1} parent=1 // pred_fallthru
      _
    // Predicated region
    $region34: #{diffusion_block_v2.1} parent=1 // pred_check
      _
    $region35: #{diffusion_block_v2.1} parent=1 // pred_check_branch
      %55 = sbr.rel (0) target = $region37
    $region36: #{diffusion_block_v2.1} parent=1 // pred_region
      %57 = dma.done [#allocation5], 2048
    $region37: #{diffusion_block_v2.1} parent=1 // pred_fallthru
      _
    %v58 = vld [vmem:[%s0] sm:$0xff]
    %v59 = vld [vmem:[%s0 + $0x8] sm:$0xff]
    %v60 = vld [vmem:[%s1] sm:$0x1]
    %v61 = vld [vmem:[%s2] sm:$0x1]
    %62 = vadd.xlane.f32.xlu0 %v58
    %v63 = vpop.xlane.xlu0 %62
    %64 = vadd.xlane.f32.xlu0 %v59
    %v65 = vpop.xlane.xlu0 %64
    %v66 = vmul.f32 %v63, 0.03125
    %v67 = vmul.f32 %v65, 0.03125
    %v68 = vsub.f32 %v58, %v66
    %v69 = vsub.f32 %v59, %v67
    %v70 = vlaneseq
    %v71 = vand.u32 %v70, 127
    %vm72 = vcmp.lt.s32.totalorder %v71, 32
    %v73 = vsel %vm72, %v68, 0.0
    %v74 = vsel %vm72, %v69, 0.0
    %v75 = vmul.f32 %v73, %v73
    %v76 = vmul.f32 %v74, %v74
    %77 = vadd.xlane.f32.xlu0 %v75
    %v78 = vpop.xlane.xlu0 %77
    %79 = vadd.xlane.f32.xlu0 %v76
    %v80 = vpop.xlane.xlu0 %79
    %v81 = vmul.f32 %v78, 0.03125
    %v82 = vmul.f32 %v80, 0.03125
    %v83 = vadd.f32 %v81, 1e-05
    %v84 = vadd.f32 %v82, 1e-05
    %v85 = vrsqrt.pop %v83
    %v86 = vmul.f32 %v85, %v83
    %v87 = vmul.f32 %v86, %v85
    %v88 = vmul.f32 0.5, %v87
    %v89 = vsub.f32 1.5, %v88
    %v90 = vmul.f32 %v85, %v89
    %vm91 = vweird.f32 %v83
    %vm92 = vweird.f32 %v85
    %vm93 = vmor %vm91, %vm92
    %v94 = vsel %vm93, %v85, %v90
    %v95 = vrsqrt.pop %v84
    %v96 = vmul.f32 %v95, %v84
    %v97 = vmul.f32 %v96, %v95
    %v98 = vmul.f32 0.5, %v97
    %v99 = vsub.f32 1.5, %v98
    %v100 = vmul.f32 %v95, %v99
    %vm101 = vweird.f32 %v84
    %vm102 = vweird.f32 %v95
    %vm103 = vmor %vm101, %vm102
    %v104 = vsel %vm103, %v95, %v100
    %v105 = vmul.f32 %v73, %v94
    %v106 = vmul.f32 %v74, %v104
    %v108 = vperm.slane %v60, 0
    %v110 = vmul.f32 %v105, %v108
    %v111 = vmul.f32 %v106, %v108
    %v113 = vperm.slane %v61, 0
    %v115 = vadd.f32 %v110, %v113
    %v116 = vadd.f32 %v111, %v113
    %v117 = vld [vmem:[#allocation2] sm:$0xff]
    %v118 = vld [vmem:[#allocation2 + $0x8] sm:$0xff]
    %v119 = vld [vmem:[#allocation2 + $0x10] sm:$0xff]
    %v120 = vld [vmem:[#allocation2 + $0x18] sm:$0xff]
    %v121 = vld [vmem:[#allocation2 + $0x20] sm:$0xff]
    %v122 = vld [vmem:[#allocation2 + $0x28] sm:$0xff]
    %v123 = vld [vmem:[#allocation2 + $0x30] sm:$0xff]
    %v124 = vld [vmem:[#allocation2 + $0x38] sm:$0xff]
    %v125 = vld [vmem:[#allocation2 + $0x40] sm:$0xff]
    %v126 = vld [vmem:[#allocation2 + $0x48] sm:$0xff]
    %v127 = vld [vmem:[#allocation2 + $0x50] sm:$0xff]
    %v128 = vld [vmem:[#allocation2 + $0x58] sm:$0xff]
    %v129 = vld [vmem:[#allocation2 + $0x60] sm:$0xff]
    %v130 = vld [vmem:[#allocation2 + $0x68] sm:$0xff]
    %v131 = vld [vmem:[#allocation2 + $0x70] sm:$0xff]
    %v132 = vld [vmem:[#allocation2 + $0x78] sm:$0xff]
    %v133 = vld [vmem:[%s4] sm:$0x1]
    %v135 = vperm.slane %v133, 0
    %137 = vmatpush.msra.mxu0 %v132
    %138 = vmatpush.msra.mxu0 %v131
    %139 = vmatpush.msra.mxu0 %v130
    %140 = vmatpush.msra.mxu0 %v129
    %141 = vmatpush.msra.mxu0 %v128
    %142 = vmatpush.msra.mxu0 %v127
    %143 = vmatpush.msra.mxu0 %v126
    %144 = vmatpush.msra.mxu0 %v125
    %145 = vmatpush.msra.mxu0 %v124
    %146 = vmatpush.msra.mxu0 %v123
    %147 = vmatpush.msra.mxu0 %v122
    %148 = vmatpush.msra.mxu0 %v121
    %149 = vmatpush.msra.mxu0 %v120
    %150 = vmatpush.msra.mxu0 %v119
    %151 = vmatpush.msra.mxu0 %v118
    %152 = vmatpush.msra.mxu0 %v117
    %153 = vmatmul.f32.gmra.mxu0 %v115
    %v154 = vpop.f32.mrf.mxu0
    %v155 = vadd.f32 %v135, %v154
    %156 = vmatmul.f32.gmra.mxu0 %v116
    %v157 = vpop.f32.mrf.mxu0
    %v158 = vadd.f32 %v135, %v157
    %159 = vdwg.mxu0
    %v160 = vxor.u32 %v155, 2147483648
    %v161 = vxor.u32 %v158, 2147483648
    %v162 = vmul.f32 %v160, 1.442695
    %v163 = vpow.pop %v162
    %v164 = vmul.f32 %v161, 1.442695
    %v165 = vpow.pop %v164
    %v166 = vadd.f32 %v163, 1.0
    %v167 = vadd.f32 %v165, 1.0
    %v168 = vrcp.pop %v166
    %v169 = vmul.f32 %v166, %v168
    %v170 = vsub.f32 1.0, %v169
    %v171 = vmul.f32 %v168, %v170
    %v172 = vadd.f32 %v168, %v171
    %vm173 = vweird.f32 %v166
    %vm174 = vweird.f32 %v168
    %vm175 = vmor %vm173, %vm174
    %v176 = vsel %vm175, %v168, %v172
    %v177 = vand.u32 2147483647, %v166
    %vm178 = vcmp.eq.f32.partialorder %v177, 8.507059e+37
    %v179 = vand.u32 %v166, 2147483648
    %v180 = vor.u32 1.1754944e-38, %v179
    %v181 = vsel %vm178, %v180, %v176
    %v182 = vmul.f32 1.0, %v181
    %v183 = vrcp.pop %v167
    %v184 = vmul.f32 %v167, %v183
    %v185 = vsub.f32 1.0, %v184
    %v186 = vmul.f32 %v183, %v185
    %v187 = vadd.f32 %v183, %v186
    %vm188 = vweird.f32 %v167
    %vm189 = vweird.f32 %v183
    %vm190 = vmor %vm188, %vm189
    %v191 = vsel %vm190, %v183, %v187
    %v192 = vand.u32 2147483647, %v167
    %vm193 = vcmp.eq.f32.partialorder %v192, 8.507059e+37
    %v194 = vand.u32 %v167, 2147483648
    %v195 = vor.u32 1.1754944e-38, %v194
    %v196 = vsel %vm193, %v195, %v191
    %v197 = vmul.f32 1.0, %v196
    %v198 = vmul.f32 %v155, %v182
    %v199 = vmul.f32 %v158, %v197
    %v200 = vld [vmem:[#allocation4] sm:$0xff]
    %v201 = vld [vmem:[#allocation4 + $0x8] sm:$0xff]
    %v202 = vld [vmem:[#allocation4 + $0x10] sm:$0xff]
    %v203 = vld [vmem:[#allocation4 + $0x18] sm:$0xff]
    %v204 = vld [vmem:[#allocation4 + $0x20] sm:$0xff]
    %v205 = vld [vmem:[#allocation4 + $0x28] sm:$0xff]
    %v206 = vld [vmem:[#allocation4 + $0x30] sm:$0xff]
    %v207 = vld [vmem:[#allocation4 + $0x38] sm:$0xff]
    %v208 = vld [vmem:[#allocation4 + $0x40] sm:$0xff]
    %v209 = vld [vmem:[#allocation4 + $0x48] sm:$0xff]
    %v210 = vld [vmem:[#allocation4 + $0x50] sm:$0xff]
    %v211 = vld [vmem:[#allocation4 + $0x58] sm:$0xff]
    %v212 = vld [vmem:[#allocation4 + $0x60] sm:$0xff]
    %v213 = vld [vmem:[#allocation4 + $0x68] sm:$0xff]
    %v214 = vld [vmem:[#allocation4 + $0x70] sm:$0xff]
    %v215 = vld [vmem:[#allocation4 + $0x78] sm:$0xff]
    %v216 = vld [vmem:[%s6] sm:$0x1]
    %v218 = vperm.slane %v216, 0
    %220 = vmatpush.msra.mxu0 %v215
    %221 = vmatpush.msra.mxu0 %v214
    %222 = vmatpush.msra.mxu0 %v213
    %223 = vmatpush.msra.mxu0 %v212
    %224 = vmatpush.msra.mxu0 %v211
    %225 = vmatpush.msra.mxu0 %v210
    %226 = vmatpush.msra.mxu0 %v209
    %227 = vmatpush.msra.mxu0 %v208
    %228 = vmatpush.msra.mxu0 %v207
    %229 = vmatpush.msra.mxu0 %v206
    %230 = vmatpush.msra.mxu0 %v205
    %231 = vmatpush.msra.mxu0 %v204
    %232 = vmatpush.msra.mxu0 %v203
    %233 = vmatpush.msra.mxu0 %v202
    %234 = vmatpush.msra.mxu0 %v201
    %235 = vmatpush.msra.mxu0 %v200
    %236 = vmatmul.f32.gmra.mxu0 %v198
    %v237 = vpop.f32.mrf.mxu0
    %v238 = vadd.f32 %v218, %v237
    %239 = vmatmul.f32.gmra.mxu0 %v199
    %v240 = vpop.f32.mrf.mxu0
    %v241 = vadd.f32 %v218, %v240
    %242 = vdwg.mxu0
    %v243 = vadd.f32 %v58, %v238
    %v244 = vadd.f32 %v59, %v241
    %245 = vst [vmem:[%s7] sm:$0xff] %v243
    %246 = vst [vmem:[%s7 + $0x8] sm:$0xff] %v244
    // Predicated region
    $region38: #{diffusion_block_v2.1} parent=1 // pred_check
      _
    $region39: #{diffusion_block_v2.1} parent=1 // pred_check_branch
      %248 = sbr.rel (0) target = $region41
    $region40: #{diffusion_block_v2.1} parent=1 // pred_region
      _
    $region41: #{diffusion_block_v2.1} parent=1 // pred_fallthru
      _
    // Predicated region
    $region42: #{diffusion_block_v2.1} parent=1 // pred_check
      _
    $region43: #{diffusion_block_v2.1} parent=1 // pred_check_branch
      %250 = sbr.rel (0) target = $region45
    $region44: #{diffusion_block_v2.1} parent=1 // pred_region
      _
    $region45: #{diffusion_block_v2.1} parent=1 // pred_fallthru
      _
    %251 = vsyncpa [#allocation3], 1
    %252 = vsyncpa [#allocation5], 1

</llo_original>
